<compile_context>
chip_gen: v7x
topology: tpu7x:2x2x1
jax: 0.10.0
libtpu: 0.0.40
codegen_flags: <defaults>
</compile_context>

<pallas_src>
import functools

import jax
import jax.numpy as jnp
from jax.experimental import pallas as pl
from jax.experimental.pallas import tpu as pltpu


# ---------------------------------------------------------------------------
# Fused kernel: BN -> ReLU -> 3x3 conv (padding=1) -> concat([conv, x])
# ---------------------------------------------------------------------------
def _dense_layer_kernel(x_ref, s_ref, sh_ref, w_ref, b_ref, o_ref,
                        vpad_ref, patch_ref, *, H, W):
    """One image per grid step, spatial flattened on the lane axis.

    x_ref:     (1, Cin, H*W)     input image (NCHW, spatial flattened)
    s_ref:     (Cin, 1)          BN scale  = gamma / sqrt(var + eps)
    sh_ref:    (Cin, 1)          BN shift  = beta - mean * scale
    w_ref:     (G, 9*Cin)        conv weight, column = (kh*3 + kw)*Cin + c
    b_ref:     (G, 1)            conv bias
    o_ref:     (1, G+Cin, H*W)   rows [0,G) = conv output, rows [G,:) = x
    vpad_ref:  (Cin, H*W+2W+2)   scratch: flat activation with zero borders
    patch_ref: (9*Cin, H*W)      scratch: im2col patch matrix
    """
    Cin = x_ref.shape[1]
    HW = H * W
    G = w_ref.shape[0]

    x = x_ref[0]                                                    # (Cin, HW)
    a = jnp.maximum(x * s_ref[...] + sh_ref[...], 0.0)              # BN + ReLU

    # Flat zero-padded activation: pixel (y, xx) lives at lane 1 + W + y*W + xx.
    # The 1+W leading / W+1 trailing zero lanes implement the top/bottom
    # (and corner) zero rows of Conv2d(padding=1).
    # (Zeroed every step: with "parallel" grid semantics each TensorCore owns
    #  its own scratch, so a program_id==0-only init would be unsafe on v7x.)
    vpad_ref[...] = jnp.zeros_like(vpad_ref)
    vpad_ref[:, 1 + W:1 + W + HW] = a
    vp = vpad_ref[...]                                              # (Cin, VPLEN)

    # Horizontal validity masks (left / right zero padding) as 0/1 floats.
    col = jax.lax.broadcasted_iota(jnp.int32, (1, HW), 1) % W
    kw_mask = ((col >= 1).astype(jnp.float32),
               None,
               (col <= W - 2).astype(jnp.float32))

    # im2col: tap (kh, kw) of output pixel p reads vp[:, p + kh*W + kw].
    # Static Python loop -> 9 contiguous lane-slice copies into patch_ref.
    for kh in range(3):
        for kw in range(3):
            t = kh * 3 + kw
            start = kh * W + kw
            tap = vp[:, start:start + HW]                           # (Cin, HW)
            if kw_mask[kw] is not None:
                tap = tap * kw_mask[kw]                             # zero OOB cols
            patch_ref[t * Cin:(t + 1) * Cin, :] = tap

    # One MXU matmul for the whole 3x3 conv: (G, 9*Cin) @ (9*Cin, H*W).
    # TODO(synk): on v6e/v7x the operands could be cast to bfloat16 (keeping
    # f32 accumulation) for 2x MXU rate / half the traffic; kept f32 so the
    # strict 1e-4 correctness check below stays exact.
    conv = jnp.dot(w_ref[...], patch_ref[...],
                   preferred_element_type=jnp.float32) + b_ref[...]  # (G, HW)

    # In-kernel channel concat: conv maps first (rows 0..G-1, sublane-aligned
    # since G is a multiple of 8 here), then the original input x.
    o_ref[0, :G, :] = conv.astype(o_ref.dtype)
    o_ref[0, G:, :] = x.astype(o_ref.dtype)


# ---------------------------------------------------------------------------
# Wrapper
# ---------------------------------------------------------------------------
def single_dense_layer(x_nchw, params):
    """cat([conv3x3(relu(bn(x))), x], channel axis); NCHW in / NCHW out."""
    N, Cin, H, W = x_nchw.shape
    s, sh, w_mat, b = params["s"], params["sh"], params["w_mat"], params["b"]
    G = w_mat.shape[0]
    Cout = G + Cin
    HW = H * W
    KC = 9 * Cin
    VPLEN = HW + 2 * W + 2

    # Free, layout-preserving reshape (NCHW stays contiguous).
    x_flat = x_nchw.reshape(N, Cin, HW).astype(jnp.float32)

    kernel = functools.partial(_dense_layer_kernel, H=H, W=W)

    out_flat = pl.pallas_call(
        kernel,
        out_shape=jax.ShapeDtypeStruct((N, Cout, HW), jnp.float32),
        grid=(N,),
        in_specs=[
            pl.BlockSpec((1, Cin, HW), lambda n: (n, 0, 0)),   # x
            pl.BlockSpec((Cin, 1), lambda n: (0, 0)),          # BN scale
            pl.BlockSpec((Cin, 1), lambda n: (0, 0)),          # BN shift
            pl.BlockSpec((G, KC), lambda n: (0, 0)),           # conv weight
            pl.BlockSpec((G, 1), lambda n: (0, 0)),            # conv bias
        ],
        out_specs=pl.BlockSpec((1, Cout, HW), lambda n: (n, 0, 0)),
        scratch_shapes=[
            pltpu.VMEM((Cin, VPLEN), jnp.float32),   # flat padded activation
            pltpu.VMEM((KC, HW), jnp.float32),       # im2col patches
        ],
        compiler_params=pltpu.CompilerParams(
            dimension_semantics=("parallel",)),
    )(x_flat, s, sh, w_mat, b)

    # Free reshape back to NCHW (memory layout already matches).
    return out_flat.reshape(N, Cout, H, W)


# ---------------------------------------------------------------------------
# Parameters (PyTorch-style raw params + kernel-ready prepared params)
# ---------------------------------------------------------------------------
def make_raw_params(key, input_channels, growth_rate):
    ks = jax.random.split(key, 6)
    gamma = jax.random.normal(ks[0], (input_channels,)) * 0.1 + 1.0
    beta = jax.random.normal(ks[1], (input_channels,)) * 0.1
    mean = jax.random.normal(ks[2], (input_channels,)) * 0.1
    var = jax.random.uniform(ks[3], (input_channels,), minval=0.5, maxval=1.5)
    w = jax.random.normal(ks[4], (growth_rate, input_channels, 3, 3)) * 0.1
    b = jax.random.normal(ks[5], (growth_rate,)) * 0.05
    return {"gamma": gamma, "beta": beta, "mean": mean, "var": var,
            "w": w, "b": b, "eps": 1e-5}


def prepare_params(raw):
    f32 = jnp.float32
    s = raw["gamma"] / jnp.sqrt(raw["var"] + raw["eps"])
    sh = raw["beta"] - raw["mean"] * s
    G, Cin, KH, KW = raw["w"].shape
    # column index = (kh*3 + kw)*Cin + c  (matches the kernel's patch layout)
    w_mat = jnp.transpose(raw["w"], (0, 2, 3, 1)).reshape(G, KH * KW * Cin)
    return {
        "s": s.reshape(Cin, 1).astype(f32),
        "sh": sh.reshape(Cin, 1).astype(f32),
        "w_mat": w_mat.astype(f32),
        "b": raw["b"].reshape(G, 1).astype(f32),
    }


# ---------------------------------------------------------------------------
# Pure-JAX reference (independent of the kernel's layout tricks)
# ---------------------------------------------------------------------------
def reference(x_nchw, raw):
    x = x_nchw.astype(jnp.float32)
    xhat = (x - raw["mean"][None, :, None, None]) / jnp.sqrt(
        raw["var"][None, :, None, None] + raw["eps"])
    a = jnp.maximum(xhat * raw["gamma"][None, :, None, None]
                    + raw["beta"][None, :, None, None], 0.0)
    out = jax.lax.conv_general_dilated(
        a, raw["w"].astype(jnp.float32), window_strides=(1, 1),
        padding=((1, 1), (1, 1)),
        dimension_numbers=("NCHW", "OIHW", "NCHW"))
    out = out + raw["b"][None, :, None, None]
    return jnp.concatenate([out, x], axis=1)


# ---------------------------------------------------------------------------
if __name__ == "__main__":
    key = jax.random.PRNGKey(0)
    k_x, k_p = jax.random.split(key)

    N, Cin, H, W = 2, 4, 16, 16
    growth_rate = 8

    x = jax.random.normal(k_x, (N, Cin, H, W), dtype=jnp.float32)
    raw = make_raw_params(k_p, Cin, growth_rate)
    params = prepare_params(raw)

    out = jax.block_until_ready(single_dense_layer(x, params))
    assert out.shape == (N, growth_rate + Cin, H, W), out.shape

    ref = jax.block_until_ready(reference(x, raw))
    max_err = float(jnp.max(jnp.abs(out - ref)))
    assert jnp.allclose(out, ref, atol=1e-4, rtol=1e-4), max_err

    print("KERNEL_OK")
</pallas_src>

<mosaic_0001>
module attributes {stable_mosaic.version = 11 : i64} {
  func.func @_dense_layer_kernel(%arg0: i32, %arg1: memref<1x4x256xf32, #tpu.memory_space<vmem>>, %arg2: memref<4x1xf32, #tpu.memory_space<vmem>>, %arg3: memref<4x1xf32, #tpu.memory_space<vmem>>, %arg4: memref<8x36xf32, #tpu.memory_space<vmem>>, %arg5: memref<8x1xf32, #tpu.memory_space<vmem>>, %arg6: memref<1x12x256xf32, #tpu.memory_space<vmem>>, %arg7: memref<4x290xf32, #tpu.memory_space<vmem>>, %arg8: memref<36x256xf32, #tpu.memory_space<vmem>>) attributes {dimension_semantics = [#tpu.dimension_semantics<parallel>], iteration_bounds = array<i64: 2>, scalar_prefetch = 0 : i64, scratch_operands = 2 : i64, tpu.core_type = #tpu.core_type<tc>, window_params = [{transform_indices = @transform_0, window_bounds = array<i64: 1, 4, 256>}, {pipeline_mode = #tpu.pipeline_mode<synchronous>, transform_indices = @transform_1, window_bounds = array<i64: 4, 1>}, {pipeline_mode = #tpu.pipeline_mode<synchronous>, transform_indices = @transform_2, window_bounds = array<i64: 4, 1>}, {pipeline_mode = #tpu.pipeline_mode<synchronous>, transform_indices = @transform_3, window_bounds = array<i64: 8, 36>}, {pipeline_mode = #tpu.pipeline_mode<synchronous>, transform_indices = @transform_4, window_bounds = array<i64: 8, 1>}, {transform_indices = @transform_5, window_bounds = array<i64: 1, 12, 256>}]} {
    %c0 = arith.constant 0 : index
    %c0_0 = arith.constant 0 : index
    %c0_1 = arith.constant 0 : index
    %0 = vector.load %arg1[%c0, %c0_0, %c0_1] : memref<1x4x256xf32, #tpu.memory_space<vmem>>, vector<1x4x256xf32>
    %1 = vector.shape_cast %0 : vector<1x4x256xf32> to vector<4x256xf32>
    %c0_2 = arith.constant 0 : index
    %c0_3 = arith.constant 0 : index
    %2 = vector.load %arg2[%c0_2, %c0_3] : memref<4x1xf32, #tpu.memory_space<vmem>>, vector<4x1xf32>
    %3 = vector.broadcast %2 : vector<4x1xf32> to vector<4x256xf32>
    %4 = arith.mulf %1, %3 : vector<4x256xf32>
    %c0_4 = arith.constant 0 : index
    %c0_5 = arith.constant 0 : index
    %5 = vector.load %arg3[%c0_4, %c0_5] : memref<4x1xf32, #tpu.memory_space<vmem>>, vector<4x1xf32>
    %6 = vector.broadcast %5 : vector<4x1xf32> to vector<4x256xf32>
    %7 = arith.addf %4, %6 : vector<4x256xf32>
    %cst = arith.constant 0.000000e+00 : f32
    %8 = vector.broadcast %cst : f32 to vector<4x256xf32>
    %9 = arith.maximumf %7, %8 : vector<4x256xf32>
    %cst_6 = arith.constant 0.000000e+00 : f32
    %10 = vector.broadcast %cst_6 : f32 to vector<4x290xf32>
    %c0_7 = arith.constant 0 : index
    %c0_8 = arith.constant 0 : index
    %11 = vector.load %arg7[%c0_7, %c0_8] : memref<4x290xf32, #tpu.memory_space<vmem>>, vector<4x290xf32>
    tpu.vector_store %arg7[%c0_7, %c0_8], %10 {strides = array<i32>} : memref<4x290xf32, #tpu.memory_space<vmem>>, vector<4x290xf32>,
    %c0_9 = arith.constant 0 : index
    %c17 = arith.constant 17 : index
    %12 = vector.load %arg7[%c0_9, %c17] : memref<4x290xf32, #tpu.memory_space<vmem>>, vector<4x256xf32>
    tpu.vector_store %arg7[%c0_9, %c17], %9 {strides = array<i32>} : memref<4x290xf32, #tpu.memory_space<vmem>>, vector<4x256xf32>,
    %c0_10 = arith.constant 0 : index
    %c0_11 = arith.constant 0 : index
    %13 = vector.load %arg7[%c0_10, %c0_11] : memref<4x290xf32, #tpu.memory_space<vmem>>, vector<4x290xf32>
    %14 = tpu.iota {dimensions = array<i32: 1>} : vector<1x256xi32>
    %c16_i32 = arith.constant 16 : i32
    %c0_i32 = arith.constant 0 : i32
    %15 = arith.cmpi eq, %c16_i32, %c0_i32 : i32
    %c1_i32 = arith.constant 1 : i32
    %16 = arith.select %15, %c1_i32, %c16_i32 : i32
    %17 = vector.broadcast %16 : i32 to vector<1x256xi32>
    %18 = arith.remsi %14, %17 : vector<1x256xi32>
    %c0_i32_12 = arith.constant 0 : i32
    %19 = vector.broadcast %c0_i32_12 : i32 to vector<1x256xi32>
    %20 = arith.cmpi ne, %18, %19 : vector<1x256xi32>
    %c0_i32_13 = arith.constant 0 : i32
    %21 = vector.broadcast %c0_i32_13 : i32 to vector<1x256xi32>
    %22 = arith.cmpi slt, %18, %21 : vector<1x256xi32>
    %c0_i32_14 = arith.constant 0 : i32
    %23 = arith.cmpi slt, %16, %c0_i32_14 : i32
    %24 = vector.broadcast %23 : i1 to vector<1x256xi1>
    %25 = vector.broadcast %24 : vector<1x256xi1> to vector<1x256xi1>
    %26 = arith.xori %22, %25 : vector<1x256xi1>
    %27 = arith.andi %26, %20 : vector<1x256xi1>
    %28 = vector.broadcast %16 : i32 to vector<1x256xi32>
    %29 = arith.addi %18, %28 : vector<1x256xi32>
    %30 = arith.select %27, %29, %18 : vector<1x256xi1>, vector<1x256xi32>
    %c1_i32_15 = arith.constant 1 : i32
    %31 = vector.broadcast %c1_i32_15 : i32 to vector<1x256xi32>
    %32 = arith.cmpi sge, %30, %31 : vector<1x256xi32>
    %33 = arith.extui %32 : vector<1x256xi1> to vector<1x256xi32>
    %34 = arith.sitofp %33 : vector<1x256xi32> to vector<1x256xf32>
    %c14_i32 = arith.constant 14 : i32
    %35 = vector.broadcast %c14_i32 : i32 to vector<1x256xi32>
    %36 = arith.cmpi sle, %30, %35 : vector<1x256xi32>
    %37 = arith.extui %36 : vector<1x256xi1> to vector<1x256xi32>
    %38 = arith.sitofp %37 : vector<1x256xi32> to vector<1x256xf32>
    %39 = vector.extract_strided_slice %13 {offsets = [0, 0], sizes = [4, 256], strides = [1, 1]} : vector<4x290xf32> to vector<4x256xf32>
    %40 = vector.broadcast %34 : vector<1x256xf32> to vector<4x256xf32>
    %41 = arith.mulf %39, %40 : vector<4x256xf32>
    %c0_16 = arith.constant 0 : index
    %c0_17 = arith.constant 0 : index
    %42 = vector.load %arg8[%c0_16, %c0_17] : memref<36x256xf32, #tpu.memory_space<vmem>>, vector<4x256xf32>
    tpu.vector_store %arg8[%c0_16, %c0_17], %41 {strides = array<i32>} : memref<36x256xf32, #tpu.memory_space<vmem>>, vector<4x256xf32>,
    %43 = vector.extract_strided_slice %13 {offsets = [0, 1], sizes = [4, 256], strides = [1, 1]} : vector<4x290xf32> to vector<4x256xf32>
    %c4 = arith.constant 4 : index
    %c0_18 = arith.constant 0 : index
    %44 = vector.load %arg8[%c4, %c0_18] : memref<36x256xf32, #tpu.memory_space<vmem>>, vector<4x256xf32>
    tpu.vector_store %arg8[%c4, %c0_18], %43 {strides = array<i32>} : memref<36x256xf32, #tpu.memory_space<vmem>>, vector<4x256xf32>,
    %45 = vector.extract_strided_slice %13 {offsets = [0, 2], sizes = [4, 256], strides = [1, 1]} : vector<4x290xf32> to vector<4x256xf32>
    %46 = vector.broadcast %38 : vector<1x256xf32> to vector<4x256xf32>
    %47 = arith.mulf %45, %46 : vector<4x256xf32>
    %c8 = arith.constant 8 : index
    %c0_19 = arith.constant 0 : index
    %48 = vector.load %arg8[%c8, %c0_19] : memref<36x256xf32, #tpu.memory_space<vmem>>, vector<4x256xf32>
    tpu.vector_store %arg8[%c8, %c0_19], %47 {strides = array<i32>} : memref<36x256xf32, #tpu.memory_space<vmem>>, vector<4x256xf32>,
    %49 = vector.extract_strided_slice %13 {offsets = [0, 16], sizes = [4, 256], strides = [1, 1]} : vector<4x290xf32> to vector<4x256xf32>
    %50 = vector.broadcast %34 : vector<1x256xf32> to vector<4x256xf32>
    %51 = arith.mulf %49, %50 : vector<4x256xf32>
    %c12 = arith.constant 12 : index
    %c0_20 = arith.constant 0 : index
    %52 = vector.load %arg8[%c12, %c0_20] : memref<36x256xf32, #tpu.memory_space<vmem>>, vector<4x256xf32>
    tpu.vector_store %arg8[%c12, %c0_20], %51 {strides = array<i32>} : memref<36x256xf32, #tpu.memory_space<vmem>>, vector<4x256xf32>,
    %53 = vector.extract_strided_slice %13 {offsets = [0, 17], sizes = [4, 256], strides = [1, 1]} : vector<4x290xf32> to vector<4x256xf32>
    %c16 = arith.constant 16 : index
    %c0_21 = arith.constant 0 : index
    %54 = vector.load %arg8[%c16, %c0_21] : memref<36x256xf32, #tpu.memory_space<vmem>>, vector<4x256xf32>
    tpu.vector_store %arg8[%c16, %c0_21], %53 {strides = array<i32>} : memref<36x256xf32, #tpu.memory_space<vmem>>, vector<4x256xf32>,
    %55 = vector.extract_strided_slice %13 {offsets = [0, 18], sizes = [4, 256], strides = [1, 1]} : vector<4x290xf32> to vector<4x256xf32>
    %56 = vector.broadcast %38 : vector<1x256xf32> to vector<4x256xf32>
    %57 = arith.mulf %55, %56 : vector<4x256xf32>
    %c20 = arith.constant 20 : index
    %c0_22 = arith.constant 0 : index
    %58 = vector.load %arg8[%c20, %c0_22] : memref<36x256xf32, #tpu.memory_space<vmem>>, vector<4x256xf32>
    tpu.vector_store %arg8[%c20, %c0_22], %57 {strides = array<i32>} : memref<36x256xf32, #tpu.memory_space<vmem>>, vector<4x256xf32>,
    %59 = vector.extract_strided_slice %13 {offsets = [0, 32], sizes = [4, 256], strides = [1, 1]} : vector<4x290xf32> to vector<4x256xf32>
    %60 = vector.broadcast %34 : vector<1x256xf32> to vector<4x256xf32>
    %61 = arith.mulf %59, %60 : vector<4x256xf32>
    %c24 = arith.constant 24 : index
    %c0_23 = arith.constant 0 : index
    %62 = vector.load %arg8[%c24, %c0_23] : memref<36x256xf32, #tpu.memory_space<vmem>>, vector<4x256xf32>
    tpu.vector_store %arg8[%c24, %c0_23], %61 {strides = array<i32>} : memref<36x256xf32, #tpu.memory_space<vmem>>, vector<4x256xf32>,
    %63 = vector.extract_strided_slice %13 {offsets = [0, 33], sizes = [4, 256], strides = [1, 1]} : vector<4x290xf32> to vector<4x256xf32>
    %c28 = arith.constant 28 : index
    %c0_24 = arith.constant 0 : index
    %64 = vector.load %arg8[%c28, %c0_24] : memref<36x256xf32, #tpu.memory_space<vmem>>, vector<4x256xf32>
    tpu.vector_store %arg8[%c28, %c0_24], %63 {strides = array<i32>} : memref<36x256xf32, #tpu.memory_space<vmem>>, vector<4x256xf32>,
    %65 = vector.extract_strided_slice %13 {offsets = [0, 34], sizes = [4, 256], strides = [1, 1]} : vector<4x290xf32> to vector<4x256xf32>
    %66 = vector.broadcast %38 : vector<1x256xf32> to vector<4x256xf32>
    %67 = arith.mulf %65, %66 : vector<4x256xf32>
    %c32 = arith.constant 32 : index
    %c0_25 = arith.constant 0 : index
    %68 = vector.load %arg8[%c32, %c0_25] : memref<36x256xf32, #tpu.memory_space<vmem>>, vector<4x256xf32>
    tpu.vector_store %arg8[%c32, %c0_25], %67 {strides = array<i32>} : memref<36x256xf32, #tpu.memory_space<vmem>>, vector<4x256xf32>,
    %c0_26 = arith.constant 0 : index
    %c0_27 = arith.constant 0 : index
    %69 = vector.load %arg4[%c0_26, %c0_27] : memref<8x36xf32, #tpu.memory_space<vmem>>, vector<8x36xf32>
    %c0_28 = arith.constant 0 : index
    %c0_29 = arith.constant 0 : index
    %70 = vector.load %arg8[%c0_28, %c0_29] : memref<36x256xf32, #tpu.memory_space<vmem>>, vector<36x256xf32>
    %cst_30 = arith.constant dense<0.000000e+00> : vector<8x256xf32>
    %71 = tpu.matmul %69, %70, %cst_30 {dimension_numbers = #tpu.dot_dimension_numbers<[1], [0], [0], [1], [0, 0, 1, 1], [], []>} : vector<8x36xf32>, vector<36x256xf32>, vector<8x256xf32> -> vector<8x256xf32>
    %c0_31 = arith.constant 0 : index
    %c0_32 = arith.constant 0 : index
    %72 = vector.load %arg5[%c0_31, %c0_32] : memref<8x1xf32, #tpu.memory_space<vmem>>, vector<8x1xf32>
    %73 = vector.broadcast %72 : vector<8x1xf32> to vector<8x256xf32>
    %74 = arith.addf %71, %73 : vector<8x256xf32>
    %c0_33 = arith.constant 0 : index
    %c0_34 = arith.constant 0 : index
    %c0_35 = arith.constant 0 : index
    %75 = vector.load %arg6[%c0_33, %c0_34, %c0_35] : memref<1x12x256xf32, #tpu.memory_space<vmem>>, vector<1x8x256xf32>
    %76 = vector.shape_cast %75 : vector<1x8x256xf32> to vector<8x256xf32>
    %77 = vector.shape_cast %74 : vector<8x256xf32> to vector<1x8x256xf32>
    tpu.vector_store %arg6[%c0_33, %c0_34, %c0_35], %77 {strides = array<i32>} : memref<1x12x256xf32, #tpu.memory_space<vmem>>, vector<1x8x256xf32>,
    %c0_36 = arith.constant 0 : index
    %c8_37 = arith.constant 8 : index
    %c0_38 = arith.constant 0 : index
    %78 = vector.load %arg6[%c0_36, %c8_37, %c0_38] : memref<1x12x256xf32, #tpu.memory_space<vmem>>, vector<1x4x256xf32>
    %79 = vector.shape_cast %78 : vector<1x4x256xf32> to vector<4x256xf32>
    %80 = vector.shape_cast %1 : vector<4x256xf32> to vector<1x4x256xf32>
    tpu.vector_store %arg6[%c0_36, %c8_37, %c0_38], %80 {strides = array<i32>} : memref<1x12x256xf32, #tpu.memory_space<vmem>>, vector<1x4x256xf32>,
    return
  }
  func.func @transform_0(%arg0: i32) -> (i32, i32, i32) {
    %c0_i32 = arith.constant 0 : i32
    %c0_i32_0 = arith.constant 0 : i32
    %c0_i32_1 = arith.constant 0 : i32
    return %arg0, %c0_i32, %c0_i32_0 : i32, i32, i32
  }
  func.func @transform_1(%arg0: i32) -> (i32, i32) {
    %c0_i32 = arith.constant 0 : i32
    %c0_i32_0 = arith.constant 0 : i32
    %c0_i32_1 = arith.constant 0 : i32
    return %c0_i32, %c0_i32_0 : i32, i32
  }
  func.func @transform_2(%arg0: i32) -> (i32, i32) {
    %c0_i32 = arith.constant 0 : i32
    %c0_i32_0 = arith.constant 0 : i32
    %c0_i32_1 = arith.constant 0 : i32
    return %c0_i32, %c0_i32_0 : i32, i32
  }
  func.func @transform_3(%arg0: i32) -> (i32, i32) {
    %c0_i32 = arith.constant 0 : i32
    %c0_i32_0 = arith.constant 0 : i32
    %c0_i32_1 = arith.constant 0 : i32
    return %c0_i32, %c0_i32_0 : i32, i32
  }
  func.func @transform_4(%arg0: i32) -> (i32, i32) {
    %c0_i32 = arith.constant 0 : i32
    %c0_i32_0 = arith.constant 0 : i32
    %c0_i32_1 = arith.constant 0 : i32
    return %c0_i32, %c0_i32_0 : i32, i32
  }
  func.func @transform_5(%arg0: i32) -> (i32, i32, i32) {
    %c0_i32 = arith.constant 0 : i32
    %c0_i32_0 = arith.constant 0 : i32
    %c0_i32_1 = arith.constant 0 : i32
    return %arg0, %c0_i32, %c0_i32_0 : i32, i32, i32
  }
}

</mosaic_0001>

<llo_original>
// kernel: tpu_custom_call.1
$region0: #{tpu_custom_call.1}
  #allocation0 [shape = 'u32[]', space=smem, size = 0x4, offset = 0x4, fixed_abs, tag = 'smem constant byte address 0x4 - core index']
  #allocation1 [shape = 'u32[144,128]{1,0:T(1,128)}', space=vmem, size = 0x12000, scoped, tag = 'internal scratch']
  #allocation2 [shape = 'f32[4,290]{1,0:T(4,128)}', space=vmem, size = 0x1800, scoped, tag = 'scratch operand']
  #allocation3 [shape = 'f32[36,256]{1,0:T(8,128)}', space=vmem, size = 0xa000, scoped, tag = 'scratch operand']
  %s0 = inlined_call_operand.vmem [shape: f32[2,4,256], index: 0, kind: input, shape index: {}]
  %s1 = inlined_call_operand.vmem [shape: f32[4,1], index: 1, kind: input, shape index: {}]
  %s2 = inlined_call_operand.vmem [shape: f32[4,1], index: 2, kind: input, shape index: {}]
  %s3 = inlined_call_operand.vmem [shape: f32[8,36], index: 3, kind: input, shape index: {}]
  %s4 = inlined_call_operand.vmem [shape: f32[8,1], index: 4, kind: input, shape index: {}]
  %s5 = inlined_call_operand.vmem [shape: f32[2,12,256], index: 5, kind: output, shape index: {}]
  %s6 = sld [smem:[#allocation0]]
  $region53: #{tpu_custom_call.1} parent=0
    _
  %s8 = ssub.s32 1, %s6
  %s9 = scalar_select 0, %s8, %s6
  loop: start=0, step=1, limit=4
  $region2: #{tpu_custom_call.1} parent=0 // loop_pre_header
    _
  $region3: #{tpu_custom_call.1} parent=0 // loop_header
    %s11 = sphi 0, %s15
    %p12 = scmp.ge.s32.totalorder %s11, 4
    %s21 = sphi 0, %s23
    %s24 = sphi 0, %s21
    %s25 = sphi 0, %s24
    %s41 = sphi 0, %s25
    %s45 = sphi 0, %s45
    %s47 = sphi 0, %s45
    %s48 = sphi 0, %s47
    %s62 = sphi 0, %s48
    %s66 = sphi 0, %s66
    %s68 = sphi 0, %s66
    %s69 = sphi 0, %s68
    %s83 = sphi 0, %s69
    %s87 = sphi 0, %s87
    %s89 = sphi 0, %s87
    %s90 = sphi 0, %s89
    %s104 = sphi 0, %s90
    %s108 = sphi 0, %s108
    %s110 = sphi 0, %s108
    %s111 = sphi 0, %s110
    %s125 = sphi 0, %s111
    %s131 = sphi 0, %s133
    %s134 = sphi 0, %s131
    %s135 = sphi 0, %s134
    %s151 = sphi 0, %s135
  $region4: #{tpu_custom_call.1} parent=0 // loop_header_branch
    %14 = sbr.rel (%p12) target = $region8
  $region5: #{tpu_custom_call.1} parent=0 // loop_body
    %s16 = ssub.s32 %s11, 1
    %s17 = ssub.s32 %s11, 2
    %s18 = sadd.s32 %s11, 1
    %s19 = ssub.s32 %s11, %s18
    %p20 = scmp.eq.s32.totalorder %s19, 0
    %s22 = sadd.s32 %s21, 1
    %s23 = scalar_select %p20, %s21, %s22
    %p26 = pneg %p20
    %p27 = scmp.eq.s32.totalorder %s11, 1
    %p28 = por %p26, %p27
    %p29 = scmp.ne.s32.totalorder %s21, %s24
    %p30 = scmp.eq.s32.totalorder %s11, 0
    %p31 = por %p29, %p30
    %p32 = scmp.ne.s32.totalorder %s21, %s24
    %p33 = scmp.eq.s32.totalorder %s16, 1
    %p34 = por %p32, %p33
    %p35 = scmp.ne.s32.totalorder %s24, %s25
    %p36 = scmp.eq.s32.totalorder %s16, 0
    %p37 = por %p35, %p36
    %p38 = scmp.ne.s32.totalorder %s24, %s25
    %p39 = scmp.eq.s32.totalorder %s17, 1
    %p40 = por %p38, %p39
    %p42 = scmp.ne.s32.totalorder %s25, %s41
    %p43 = scmp.eq.s32.totalorder %s17, 0
    %p44 = por %p42, %p43
    %s46 = sadd.s32 %s45, 1
    %p49 = scmp.eq.s32.totalorder %s11, 1
    %p50 = scmp.ne.s32.totalorder %s45, %s47
    %p51 = scmp.eq.s32.totalorder %s11, 0
    %p52 = por %p50, %p51
    %p53 = scmp.ne.s32.totalorder %s45, %s47
    %p54 = scmp.eq.s32.totalorder %s16, 1
    %p55 = por %p53, %p54
    %p56 = scmp.ne.s32.totalorder %s47, %s48
    %p57 = scmp.eq.s32.totalorder %s16, 0
    %p58 = por %p56, %p57
    %p59 = scmp.ne.s32.totalorder %s47, %s48
    %p60 = scmp.eq.s32.totalorder %s17, 1
    %p61 = por %p59, %p60
    %p63 = scmp.ne.s32.totalorder %s48, %s62
    %p64 = scmp.eq.s32.totalorder %s17, 0
    %p65 = por %p63, %p64
    %s67 = sadd.s32 %s66, 1
    %p70 = scmp.eq.s32.totalorder %s11, 1
    %p71 = scmp.ne.s32.totalorder %s66, %s68
    %p72 = scmp.eq.s32.totalorder %s11, 0
    %p73 = por %p71, %p72
    %p74 = scmp.ne.s32.totalorder %s66, %s68
    %p75 = scmp.eq.s32.totalorder %s16, 1
    %p76 = por %p74, %p75
    %p77 = scmp.ne.s32.totalorder %s68, %s69
    %p78 = scmp.eq.s32.totalorder %s16, 0
    %p79 = por %p77, %p78
    %p80 = scmp.ne.s32.totalorder %s68, %s69
    %p81 = scmp.eq.s32.totalorder %s17, 1
    %p82 = por %p80, %p81
    %p84 = scmp.ne.s32.totalorder %s69, %s83
    %p85 = scmp.eq.s32.totalorder %s17, 0
    %p86 = por %p84, %p85
    %s88 = sadd.s32 %s87, 1
    %p91 = scmp.eq.s32.totalorder %s11, 1
    %p92 = scmp.ne.s32.totalorder %s87, %s89
    %p93 = scmp.eq.s32.totalorder %s11, 0
    %p94 = por %p92, %p93
    %p95 = scmp.ne.s32.totalorder %s87, %s89
    %p96 = scmp.eq.s32.totalorder %s16, 1
    %p97 = por %p95, %p96
    %p98 = scmp.ne.s32.totalorder %s89, %s90
    %p99 = scmp.eq.s32.totalorder %s16, 0
    %p100 = por %p98, %p99
    %p101 = scmp.ne.s32.totalorder %s89, %s90
    %p102 = scmp.eq.s32.totalorder %s17, 1
    %p103 = por %p101, %p102
    %p105 = scmp.ne.s32.totalorder %s90, %s104
    %p106 = scmp.eq.s32.totalorder %s17, 0
    %p107 = por %p105, %p106
    %s109 = sadd.s32 %s108, 1
    %p112 = scmp.eq.s32.totalorder %s11, 1
    %p113 = scmp.ne.s32.totalorder %s108, %s110
    %p114 = scmp.eq.s32.totalorder %s11, 0
    %p115 = por %p113, %p114
    %p116 = scmp.ne.s32.totalorder %s108, %s110
    %p117 = scmp.eq.s32.totalorder %s16, 1
    %p118 = por %p116, %p117
    %p119 = scmp.ne.s32.totalorder %s110, %s111
    %p120 = scmp.eq.s32.totalorder %s16, 0
    %p121 = por %p119, %p120
    %p122 = scmp.ne.s32.totalorder %s110, %s111
    %p123 = scmp.eq.s32.totalorder %s17, 1
    %p124 = por %p122, %p123
    %p126 = scmp.ne.s32.totalorder %s111, %s125
    %p127 = scmp.eq.s32.totalorder %s17, 0
    %p128 = por %p126, %p127
    %s129 = ssub.s32 %s11, %s18
    %p130 = scmp.eq.s32.totalorder %s129, 0
    %s132 = sadd.s32 %s131, 1
    %s133 = scalar_select %p130, %s131, %s132
    %p136 = pneg %p130
    %p137 = scmp.eq.s32.totalorder %s11, 1
    %p138 = por %p136, %p137
    %p139 = scmp.ne.s32.totalorder %s131, %s134
    %p140 = scmp.eq.s32.totalorder %s11, 0
    %p141 = por %p139, %p140
    %p142 = scmp.ne.s32.totalorder %s131, %s134
    %p143 = scmp.eq.s32.totalorder %s16, 1
    %p144 = por %p142, %p143
    %p145 = scmp.ne.s32.totalorder %s134, %s135
    %p146 = scmp.eq.s32.totalorder %s16, 0
    %p147 = por %p145, %p146
    %p148 = scmp.ne.s32.totalorder %s134, %s135
    %p149 = scmp.eq.s32.totalorder %s17, 1
    %p150 = por %p148, %p149
    %p152 = scmp.ne.s32.totalorder %s135, %s151
    %p153 = scmp.eq.s32.totalorder %s17, 0
    %p154 = por %p152, %p153
    %p155 = scmp.le.s32.totalorder 1, %s11
    %p156 = scmp.lt.s32.totalorder %s11, 3
    %p157 = pnand %p155, %p156
    %p158 = pneg %p157
    // Predicated region
    $region9: #{tpu_custom_call.1} parent=5 // pred_check
      _
    $region10: #{tpu_custom_call.1} parent=5 // pred_check_branch
      %160 = sbr.rel (%p157) target = $region12
    $region11: #{tpu_custom_call.1} parent=5 // pred_region
      %s161 = ssub.s32 %s11, 1
      // Predicated region
      $region13: #{tpu_custom_call.1} parent=11 // pred_check
        %p162 = pneg %p58
      $region14: #{tpu_custom_call.1} parent=11 // pred_check_branch
        %164 = sbr.rel (%p162) target = $region16
      $region15: #{tpu_custom_call.1} parent=11 // pred_region
        _
      $region16: #{tpu_custom_call.1} parent=11 // pred_fallthru
        _
      // Predicated region
      $region17: #{tpu_custom_call.1} parent=11 // pred_check
        %p165 = pneg %p79
      $region18: #{tpu_custom_call.1} parent=11 // pred_check_branch
        %167 = sbr.rel (%p165) target = $region20
      $region19: #{tpu_custom_call.1} parent=11 // pred_region
        _
      $region20: #{tpu_custom_call.1} parent=11 // pred_fallthru
        _
      // Predicated region
      $region21: #{tpu_custom_call.1} parent=11 // pred_check
        %p168 = pneg %p100
      $region22: #{tpu_custom_call.1} parent=11 // pred_check_branch
        %170 = sbr.rel (%p168) target = $region24
      $region23: #{tpu_custom_call.1} parent=11 // pred_region
        _
      $region24: #{tpu_custom_call.1} parent=11 // pred_fallthru
        _
      // Predicated region
      $region25: #{tpu_custom_call.1} parent=11 // pred_check
        %p171 = pneg %p121
      $region26: #{tpu_custom_call.1} parent=11 // pred_check_branch
        %173 = sbr.rel (%p171) target = $region28
      $region27: #{tpu_custom_call.1} parent=11 // pred_region
        _
      $region28: #{tpu_custom_call.1} parent=11 // pred_fallthru
        _
    $region12: #{tpu_custom_call.1} parent=5 // pred_fallthru
      _
    %p174 = scmp.lt.s32.totalorder %s11, 2
    // Predicated region
    $region29: #{tpu_custom_call.1} parent=5 // pred_check
      %p175 = pneg %p174
    $region30: #{tpu_custom_call.1} parent=5 // pred_check_branch
      %177 = sbr.rel (%p175) target = $region32
    $region31: #{tpu_custom_call.1} parent=5 // pred_region
      // Predicated region
      $region33: #{tpu_custom_call.1} parent=31 // pred_check
        %p178 = pneg %p31
      $region34: #{tpu_custom_call.1} parent=31 // pred_check_branch
        %180 = sbr.rel (%p178) target = $region36
      $region35: #{tpu_custom_call.1} parent=31 // pred_region
        %p181 = scmp.lt.s32.totalorder %s11, 1
        %s182 = scalar_select %p181, %s11, 1
        %s183 = smul.addr %s182, 2
        %s184 = smul.addr %s183, 4
        %s185 = scalar_lea.vmem %s0, %s184
      $region36: #{tpu_custom_call.1} parent=31 // pred_fallthru
        _
    $region32: #{tpu_custom_call.1} parent=5 // pred_fallthru
      _
    %p186 = scmp.le.s32.totalorder 1, %s11
    %p187 = scmp.lt.s32.totalorder %s11, 3
    %p188 = pnand %p186, %p187
    %p189 = pneg %p188
    // Predicated region
    $region37: #{tpu_custom_call.1} parent=5 // pred_check
      _
    $region38: #{tpu_custom_call.1} parent=5 // pred_check_branch
      %191 = sbr.rel (%p188) target = $region40
    $region39: #{tpu_custom_call.1} parent=5 // pred_region
      %s192 = ssub.s32 %s11, 1
      %p193 = scmp.lt.s32.totalorder %s16, 1
      %s194 = scalar_select %p193, %s16, 1
      %s195 = smul.addr %s194, 2
      %s196 = smul.addr %s195, 4
      %s197 = scalar_lea.vmem %s0, %s196
      %p198 = pneg %p37
      %p199 = pneg %p34
      %p200 = pneg %p58
      %p201 = pneg %p55
      %p202 = pneg %p79
      %p203 = pneg %p76
      %p204 = pneg %p100
      %p205 = pneg %p97
      %p206 = pneg %p121
      %p207 = pneg %p118
      %p208 = pneg %p147
      %p209 = pneg %p144
      %p210 = scmp.lt.s32.totalorder %s16, 1
      %s211 = scalar_select %p210, %s16, 1
      %s212 = smul.addr %s211, 4
      %s213 = smul.addr %s212, 8
      %s214 = scalar_lea.vmem %s5, %s213
      %p215 = scmp.lt.s32.totalorder %s16, 1
      %s216 = scalar_select %p215, %s16, 1
      %s217 = smul.addr %s216, 2
      %s218 = smul.addr %s217, 4
      %s219 = scalar_lea.vmem %s0, %s218
      %p220 = scmp.lt.s32.totalorder %s16, 1
      %s221 = scalar_select %p220, %s16, 1
      %s222 = smul.addr %s221, 4
      %s223 = smul.addr %s222, 8
      %s224 = scalar_lea.vmem %s5, %s223
      %v225 = vld [vmem:[%s219] sm:$0xff]
      %v226 = vld [vmem:[%s1] sm:$0xf]
      %228 = vset.pattern.permute.xlu0 0
      %229 = vperm.xlu0 %228, %v226
      %v230 = vpop.permute.xlu0 %229
      %v232 = vunpack.c.l.s4 839922192
      %v233 = vunpack.c.0.s8 %v232
      %v234 = vlaneseq
      %v235 = vshrl.u32 %v234, 7
      %v236 = vsub.s32 %v233, %v235
      %v237 = vrot.slane %v230, %v236
      %v239 = vmul.f32 %v225, %v237
      %v240 = vld [vmem:[%s2] sm:$0xf]
      %242 = vset.pattern.permute.xlu0 0
      %243 = vperm.xlu0 %242, %v240
      %v244 = vpop.permute.xlu0 %243
      %v246 = vunpack.c.l.s4 839922192
      %v247 = vunpack.c.0.s8 %v246
      %v248 = vlaneseq
      %v249 = vshrl.u32 %v248, 7
      %v250 = vsub.s32 %v247, %v249
      %v251 = vrot.slane %v244, %v250
      %v253 = vadd.f32 %v239, %v251
      %v254 = vmax.f32 %v253, 0.0
      %255 = vst [vmem:[#allocation2] sm:$0xff] 0.0
      %vm256 = vcmask 273408
      %257 = vst.msk [vmem:[#allocation2 + $0x8] sm:$0xf] %vm256, 0.0
      %259 = vrot.lane.b32.xlu0 %v254, 17
      %v260 = vpop.permute.xlu0 %259
      %v261 = vrot.slane %v260, 4
      %vm262 = vcmask 138240
      %v263 = vsel %vm262, %v261, %v260
      %vm266 = vcmask 1043592
      %vm267 = vcmask 1047556
      %vm268 = vmor %vm267, %vm266
      %269 = vst.msk [vmem:[#allocation2] sm:$0xff] %vm268, %v263
      %vm270 = vcmask 134144
      %271 = vst.msk [vmem:[#allocation2 + $0x8] sm:$0xf] %vm270, %v261
      %v272 = vld [vmem:[#allocation2] sm:$0xff]
      %v273 = vld [vmem:[#allocation2 + $0x8] sm:$0xf]
      %v274 = vlaneseq
      %v275 = vand.u32 %v274, 127
      %v276 = vadd.s32 %v275, 128
      %vm277 = vcmp.lt.s32.totalorder %v275, 0
      %v278 = vsub.s32 0, %v275
      %v279 = vsel %vm277, %v278, %v275
      %v280 = vshrl.u32 %v279, 4
      %v281 = vand.u32 %v279, 15
      %v282 = vsub.s32 0, %v281
      %v283 = vsel %vm277, %v282, %v281
      %vm284 = vcmp.lt.s32.totalorder %v276, 0
      %v285 = vsub.s32 0, %v276
      %v286 = vsel %vm284, %v285, %v276
      %v287 = vshrl.u32 %v286, 4
      %v288 = vand.u32 %v286, 15
      %v289 = vsub.s32 0, %v288
      %v290 = vsel %vm284, %v289, %v288
      %vm291 = vcmp.ne.s32.totalorder %v283, 0
      %vm292 = vcmp.ne.s32.totalorder %v290, 0
      %vm293 = vcmp.lt.s32.totalorder %v283, 0
      %vm294 = vcmp.lt.s32.totalorder %v290, 0
      %vm295 = vmand %vm293, %vm291
      %vm296 = vmand %vm294, %vm292
      %v297 = vadd.s32 %v283, 16
      %v298 = vadd.s32 %v290, 16
      %v299 = vsel %vm295, %v297, %v283
      %v300 = vsel %vm296, %v298, %v290
      %vm301 = vcmp.ge.s32.totalorder %v299, 1
      %vm302 = vcmp.ge.s32.totalorder %v300, 1
      %v303 = vsel %vm301, 1, 0
      %v304 = vsel %vm302, 1, 0
      %v305 = vcvt.s32.f32 %v303
      %v306 = vcvt.s32.f32 %v304
      %vm307 = vcmp.le.s32.totalorder %v299, 14
      %vm308 = vcmp.le.s32.totalorder %v300, 14
      %v309 = vsel %vm307, 1, 0
      %v310 = vsel %vm308, 1, 0
      %v311 = vcvt.s32.f32 %v309
      %v312 = vcvt.s32.f32 %v310
      %v315 = vcombine.low %v305, %v306
      %v317 = vmul.f32 %v272, %v315
      %v319 = vcombine.high %v317, %v317
      %321 = vst [vmem:[#allocation3] sm:$0xf] %v317
      %322 = vst [vmem:[#allocation3 + $0x8] sm:$0xf] %v319
      %v325 = vcombine.low %v272, %v272
      %v326 = vcombine.low %v273, %v273
      %327 = vrot.lane.b32.xlu0 %v325, 127
      %v328 = vpop.permute.xlu0 %327
      %329 = vrot.lane.b32.xlu0 %v272, 127
      %v330 = vpop.permute.xlu0 %329
      %331 = vrot.lane.b32.xlu0 %v326, 127
      %v332 = vpop.permute.xlu0 %331
      %vm333 = vcmask 1039360
      %v334 = vsel %vm333, %v328, %v330
      %v335 = vsel %vm333, %v330, %v332
      %338 = vst [vmem:[#allocation3] sm:$0xf0] %v334
      %339 = vst [vmem:[#allocation3 + $0x8] sm:$0xf0] %v335
      %v342 = vcombine.low %v311, %v312
      %343 = vrot.lane.b32.xlu0 %v342, 2
      %v344 = vpop.permute.xlu0 %343
      %v345 = vrot.slane %v344, 4
      %vm346 = vcmask 15360
      %v347 = vsel %vm346, %v345, %v344
      %v350 = vmul.f32 %v272, %v347
      %v351 = vmul.f32 %v273, %v345
      %v354 = vcombine.high %v350, %v350
      %355 = vrot.lane.b32.xlu0 %v350, 126
      %v356 = vpop.permute.xlu0 %355
      %357 = vrot.lane.b32.xlu0 %v354, 126
      %v358 = vpop.permute.xlu0 %357
      %359 = vrot.lane.b32.xlu0 %v351, 126
      %v360 = vpop.permute.xlu0 %359
      %vm361 = vcmask 1031168
      %v362 = vsel %vm361, %v356, %v358
      %v363 = vsel %vm361, %v358, %v360
      %366 = vst [vmem:[#allocation3 + $0x10] sm:$0xf] %v362
      %367 = vst [vmem:[#allocation3 + $0x18] sm:$0xf] %v363
      %368 = vrot.lane.b32.xlu0 %v315, 16
      %v369 = vpop.permute.xlu0 %368
      %v370 = vrot.slane %v369, 4
      %vm371 = vcmask 130048
      %v372 = vsel %vm371, %v370, %v369
      %v375 = vmul.f32 %v272, %v372
      %v376 = vmul.f32 %v273, %v370
      %v379 = vcombine.low %v375, %v375
      %v380 = vcombine.low %v376, %v376
      %381 = vrot.lane.b32.xlu0 %v379, 112
      %v382 = vpop.permute.xlu0 %381
      %383 = vrot.lane.b32.xlu0 %v375, 112
      %v384 = vpop.permute.xlu0 %383
      %385 = vrot.lane.b32.xlu0 %v380, 112
      %v386 = vpop.permute.xlu0 %385
      %vm387 = vcmask 916480
      %v388 = vsel %vm387, %v382, %v384
      %v389 = vsel %vm387, %v384, %v386
      %392 = vst [vmem:[#allocation3 + $0x10] sm:$0xf0] %v388
      %393 = vst [vmem:[#allocation3 + $0x18] sm:$0xf0] %v389
      %v394 = vcombine.high %v272, %v272
      %395 = vrot.lane.b32.xlu0 %v272, 111
      %v396 = vpop.permute.xlu0 %395
      %397 = vrot.lane.b32.xlu0 %v394, 111
      %v398 = vpop.permute.xlu0 %397
      %399 = vrot.lane.b32.xlu0 %v273, 111
      %v400 = vpop.permute.xlu0 %399
      %vm401 = vcmask 908288
      %v402 = vsel %vm401, %v396, %v398
      %v403 = vsel %vm401, %v398, %v400
      %406 = vst [vmem:[#allocation3 + $0x20] sm:$0xf] %v402
      %407 = vst [vmem:[#allocation3 + $0x28] sm:$0xf] %v403
      %408 = vrot.lane.b32.xlu0 %v342, 18
      %v409 = vpop.permute.xlu0 %408
      %v410 = vrot.slane %v409, 4
      %vm411 = vcmask 146432
      %v412 = vsel %vm411, %v410, %v409
      %v415 = vmul.f32 %v272, %v412
      %v416 = vmul.f32 %v273, %v410
      %v419 = vcombine.low %v415, %v415
      %v420 = vcombine.low %v416, %v416
      %421 = vrot.lane.b32.xlu0 %v419, 110
      %v422 = vpop.permute.xlu0 %421
      %423 = vrot.lane.b32.xlu0 %v415, 110
      %v424 = vpop.permute.xlu0 %423
      %425 = vrot.lane.b32.xlu0 %v420, 110
      %v426 = vpop.permute.xlu0 %425
      %vm427 = vcmask 900096
      %v428 = vsel %vm427, %v422, %v424
      %v429 = vsel %vm427, %v424, %v426
      %432 = vst [vmem:[#allocation3 + $0x20] sm:$0xf0] %v428
      %433 = vst [vmem:[#allocation3 + $0x28] sm:$0xf0] %v429
      %434 = vrot.lane.b32.xlu0 %v315, 32
      %v435 = vpop.permute.xlu0 %434
      %v436 = vrot.slane %v435, 4
      %vm437 = vcmask 261120
      %v438 = vsel %vm437, %v436, %v435
      %v441 = vmul.f32 %v272, %v438
      %v442 = vmul.f32 %v273, %v436
      %v445 = vcombine.high %v441, %v441
      %446 = vrot.lane.b32.xlu0 %v441, 96
      %v447 = vpop.permute.xlu0 %446
      %448 = vrot.lane.b32.xlu0 %v445, 96
      %v449 = vpop.permute.xlu0 %448
      %450 = vrot.lane.b32.xlu0 %v442, 96
      %v451 = vpop.permute.xlu0 %450
      %vm452 = vcmask 785408
      %v453 = vsel %vm452, %v447, %v449
      %v454 = vsel %vm452, %v449, %v451
      %457 = vst [vmem:[#allocation3 + $0x30] sm:$0xf] %v453
      %458 = vst [vmem:[#allocation3 + $0x38] sm:$0xf] %v454
      %459 = vrot.lane.b32.xlu0 %v325, 95
      %v460 = vpop.permute.xlu0 %459
      %461 = vrot.lane.b32.xlu0 %v272, 95
      %v462 = vpop.permute.xlu0 %461
      %463 = vrot.lane.b32.xlu0 %v326, 95
      %v464 = vpop.permute.xlu0 %463
      %vm465 = vcmask 777216
      %v466 = vsel %vm465, %v460, %v462
      %v467 = vsel %vm465, %v462, %v464
      %470 = vst [vmem:[#allocation3 + $0x30] sm:$0xf0] %v466
      %471 = vst [vmem:[#allocation3 + $0x38] sm:$0xf0] %v467
      %472 = vrot.lane.b32.xlu0 %v342, 34
      %v473 = vpop.permute.xlu0 %472
      %v474 = vrot.slane %v473, 4
      %vm475 = vcmask 277504
      %v476 = vsel %vm475, %v474, %v473
      %v479 = vmul.f32 %v272, %v476
      %v480 = vmul.f32 %v273, %v474
      %v483 = vcombine.high %v479, %v479
      %484 = vrot.lane.b32.xlu0 %v479, 94
      %v485 = vpop.permute.xlu0 %484
      %486 = vrot.lane.b32.xlu0 %v483, 94
      %v487 = vpop.permute.xlu0 %486
      %488 = vrot.lane.b32.xlu0 %v480, 94
      %v489 = vpop.permute.xlu0 %488
      %vm490 = vcmask 769024
      %v491 = vsel %vm490, %v485, %v487
      %v492 = vsel %vm490, %v487, %v489
      %495 = vst [vmem:[#allocation3 + $0x40] sm:$0xf] %v491
      %496 = vst [vmem:[#allocation3 + $0x48] sm:$0xf] %v492
      %v497 = vld [vmem:[%s3] sm:$0xff]
      %v498 = vld [vmem:[#allocation3] sm:$0xff]
      %v499 = vld [vmem:[#allocation3 + $0x8] sm:$0xff]
      %v500 = vld [vmem:[#allocation3 + $0x10] sm:$0xff]
      %v501 = vld [vmem:[#allocation3 + $0x18] sm:$0xff]
      %v502 = vld [vmem:[#allocation3 + $0x20] sm:$0xff]
      %v503 = vld [vmem:[#allocation3 + $0x28] sm:$0xff]
      %v504 = vld [vmem:[#allocation3 + $0x30] sm:$0xff]
      %v505 = vld [vmem:[#allocation3 + $0x38] sm:$0xff]
      %v506 = vld [vmem:[#allocation3 + $0x40] sm:$0xf]
      %v507 = vld [vmem:[#allocation3 + $0x48] sm:$0xf]
      %v508 = vld [vmem:[%s4] sm:$0xff]
      %510 = vset.pattern.permute.xlu0 0
      %511 = vperm.xlu0 %510, %v508
      %v512 = vpop.permute.xlu0 %511
      %vm514 = vcmask 293888
      %v516 = vsel %vm514, %v497, 0
      %vm518 = vcmask 1043456
      %v520 = vsel %vm518, %v506, 0
      %v523 = vsel %vm518, %v507, 0
      %525 = vmatprep.subr.mxu0 %v499
      %526 = vmatpush1.msra.mxu0 %v498
      %527 = vmatprep.subr.mxu0 %v501
      %528 = vmatpush1.msra.mxu0 %v500
      %529 = vmatprep.subr.mxu0 %v503
      %530 = vmatpush1.msra.mxu0 %v502
      %531 = vmatprep.subr.mxu0 %v505
      %532 = vmatpush1.msra.mxu0 %v504
      %533 = vmatprep.subr.mxu0 %v523
      %534 = vmatpush1.msra.mxu0 %v520
      %535 = vmatprep.subr.mxu0 0.0
      %536 = vmatpush1.msra.mxu0 0.0
      %537 = vmatprep.subr.mxu0 0.0
      %538 = vmatpush1.msra.mxu0 0.0
      %539 = vmatprep.subr.mxu0 0.0
      %540 = vmatpush1.msra.mxu0 0.0
      %541 = vmatprep.subr.mxu0 0.0
      %542 = vmatpush1.msra.mxu0 0.0
      %543 = vmatprep.subr.mxu0 0.0
      %544 = vmatpush1.msra.mxu0 0.0
      %545 = vmatprep.subr.mxu0 0.0
      %546 = vmatpush1.msra.mxu0 0.0
      %547 = vmatprep.subr.mxu0 0.0
      %548 = vmatpush1.msra.mxu0 0.0
      %549 = vmatprep.subr.mxu0 0.0
      %550 = vmatpush1.msra.mxu0 0.0
      %551 = vmatprep.subr.mxu0 0.0
      %552 = vmatpush1.msra.mxu0 0.0
      %553 = vmatprep.subr.mxu0 0.0
      %554 = vmatpush1.msra.mxu0 0.0
      %555 = vmatprep.subr.mxu0 0.0
      %556 = vmatpush1.msra.mxu0 0.0
      %557 = vmatprep.subr.mxu0 0.0
      %558 = vmatpush1.msra.mxu0 0.0
      %559 = vmatprep.subr.mxu0 0.0
      %560 = vmatpush1.msra.mxu0 0.0
      %561 = vmatprep.subr.mxu0 0.0
      %562 = vmatpush1.msra.mxu0 0.0
      %563 = vmatprep.subr.mxu0 0.0
      %564 = vmatpush1.msra.mxu0 0.0
      %565 = vmatprep.subr.mxu0 0.0
      %566 = vmatpush1.msra.mxu0 0.0
      %567 = vmatprep.subr.mxu0 0.0
      %568 = vmatpush1.msra.mxu0 0.0
      %569 = vmatprep.subr.mxu0 0.0
      %570 = vmatpush1.msra.mxu0 0.0
      %571 = vmatprep.subr.mxu0 0.0
      %572 = vmatpush1.msra.mxu0 0.0
      %573 = vmatprep.subr.mxu0 0.0
      %574 = vmatpush1.msra.mxu0 0.0
      %575 = vmatprep.subr.mxu0 0.0
      %576 = vmatpush1.msra.mxu0 0.0
      %577 = vmatprep.subr.mxu0 0.0
      %578 = vmatpush1.msra.mxu0 0.0
      %579 = vmatprep.subr.mxu0 0.0
      %580 = vmatpush1.msra.mxu0 0.0
      %581 = vmatprep.subr.mxu0 0.0
      %582 = vmatpush1.msra.mxu0 0.0
      %583 = vmatprep.subr.mxu0 0.0
      %584 = vmatpush1.msra.mxu0 0.0
      %585 = vmatprep.subr.mxu0 0.0
      %586 = vmatpush1.msra.mxu0 0.0
      %587 = vmatprep.subr.mxu0 0.0
      %588 = vmatpush1.msra.mxu0 0.0
      %589 = vmatprep.mubr.f32.mxu0 0.0
      %590 = vmatmul.mubr.f32.gmra.mrb[0].mxu0 %v516
      %v591 = vpop.f32.mrb[0].mxu0
      %v592 = vadd.f32 %v512, %v591
      %v593 = vpop.f32.mrb[0].mxu0
      %v594 = vadd.f32 %v512, %v593
      %595 = vdwg.mxu0
      %596 = vst [vmem:[%s224] sm:$0xff] %v592
      %597 = vst [vmem:[%s224 + $0x8] sm:$0xff] %v594
      %v599 = vcombine.high %v225, %v225
      %601 = vst [vmem:[%s224 + $0x10] sm:$0xf] %v225
      %602 = vst [vmem:[%s224 + $0x18] sm:$0xf] %v599
      %p603 = scmp.lt.s32.totalorder %s16, 1
      %s604 = scalar_select %p603, %s16, 1
      %s605 = smul.addr %s604, 4
      %s606 = smul.addr %s605, 8
      %s607 = scalar_lea.vmem %s5, %s606
      // Predicated region
      $region41: #{tpu_custom_call.1} parent=39 // pred_check
        %p608 = pneg %p144
      $region42: #{tpu_custom_call.1} parent=39 // pred_check_branch
        %610 = sbr.rel (%p608) target = $region44
      $region43: #{tpu_custom_call.1} parent=39 // pred_region
        _
      $region44: #{tpu_custom_call.1} parent=39 // pred_fallthru
        _
    $region40: #{tpu_custom_call.1} parent=5 // pred_fallthru
      _
    %p611 = scmp.le.s32.totalorder 2, %s11
    // Predicated region
    $region45: #{tpu_custom_call.1} parent=5 // pred_check
      %p612 = pneg %p611
    $region46: #{tpu_custom_call.1} parent=5 // pred_check_branch
      %614 = sbr.rel (%p612) target = $region48
    $region47: #{tpu_custom_call.1} parent=5 // pred_region
      %s615 = ssub.s32 %s11, 2
      // Predicated region
      $region49: #{tpu_custom_call.1} parent=47 // pred_check
        %p616 = pneg %p150
      $region50: #{tpu_custom_call.1} parent=47 // pred_check_branch
        %618 = sbr.rel (%p616) target = $region52
      $region51: #{tpu_custom_call.1} parent=47 // pred_region
        %p619 = scmp.lt.s32.totalorder %s17, 1
        %s620 = scalar_select %p619, %s17, 1
        %s621 = smul.addr %s620, 4
        %s622 = smul.addr %s621, 8
        %s623 = scalar_lea.vmem %s5, %s622
      $region52: #{tpu_custom_call.1} parent=47 // pred_fallthru
        _
    $region48: #{tpu_custom_call.1} parent=5 // pred_fallthru
      _
  $region6: #{tpu_custom_call.1} parent=0 // loop_footer
    %s15 = sadd.s32 1, %s11
  $region7: #{tpu_custom_call.1} parent=0 // loop_footer_branch
    %10 = sbr.rel target = $region3
  $region8: #{tpu_custom_call.1} parent=0 // loop_exit
    _

</llo_original>
